<compile_context>
chip_gen: v5e
topology: v5e:2x2
jax: 0.10.0
libtpu: 0.0.40
codegen_flags: <defaults>
</compile_context>

<pallas_src>
import functools
import numpy as np
import jax
import jax.numpy as jnp
from jax.experimental import pallas as pl
from jax.experimental.pallas import tpu as pltpu

NEG_SLOPE = 0.1
GN_GROUPS = 32
GN_EPS = 1e-5
_VMEM_LIMIT = 32 * 1024 * 1024


# ----------------------------------------------------------------------------
# Kernel 1: ConvTranspose2d (sub-pixel form) + GroupNorm + LeakyReLU
# ----------------------------------------------------------------------------
def _deconv_gn_lrelu_kernel(xp_ref, wc_ref, b4_ref, g4_ref, be4_ref,
                            m4_ref, m4t_ref, o_ref, *, cnt, eps, neg):
    H = xp_ref.shape[1] - 2
    W = xp_ref.shape[2] - 2
    C = xp_ref.shape[3]
    wdt = wc_ref.dtype
    xp = xp_ref[0]                                     # (H+2, W+2, C), f32

    # im2col over 3x3 windows of the once-padded low-res input.  One matmul
    # produces all four sub-pixel output phases as lane blocks of width C:
    # columns = [ (py,px)=(0,0) | (0,1) | (1,0) | (1,1) ].
    cols = []
    for dy in range(3):
        for dx in range(3):
            cols.append(xp[dy:dy + H, dx:dx + W, :].reshape(H * W, C))
    slab = jnp.concatenate(cols, axis=-1)              # (H*W, 9C)
    y = jnp.dot(slab.astype(wdt), wc_ref[...],
                preferred_element_type=jnp.float32)
    y = y + b4_ref[...]                                # (H*W, 4C)

    # GroupNorm(32, C) computed directly in phase-column space (the stats are
    # order independent); two-pass centered variance for numerical robustness.
    inv_cnt = 1.0 / cnt
    s1 = jnp.sum(y, axis=0, keepdims=True)                                 # (1,4C)
    gmean = jnp.dot(s1, m4_ref[...], preferred_element_type=jnp.float32) * inv_cnt
    mean_c = jnp.dot(gmean, m4t_ref[...], preferred_element_type=jnp.float32)
    d = y - mean_c
    s2 = jnp.sum(d * d, axis=0, keepdims=True)
    gvar = jnp.dot(s2, m4_ref[...], preferred_element_type=jnp.float32) * inv_cnt
    var_c = jnp.dot(gvar, m4t_ref[...], preferred_element_type=jnp.float32)
    ynorm = d * jax.lax.rsqrt(var_c + eps) * g4_ref[...] + be4_ref[...]
    ylr = jnp.where(ynorm >= 0, ynorm, ynorm * neg)

    # Even / odd output rows -> separate sub-planes of the output block; the
    # column phases stay packed along the channel dim.  The full spatial
    # interleave is then a free row-major reshape outside the kernel.
    C2 = 2 * C
    o_ref[0, :, 0, :, :] = ylr[:, :C2].reshape(H, W, C2)   # even output rows
    o_ref[0, :, 1, :, :] = ylr[:, C2:].reshape(H, W, C2)   # odd output rows


# ----------------------------------------------------------------------------
# Kernel 2: concat + ResBlock (1x1 -> LReLU -> 1x1 -> LReLU -> 3x3 -> LReLU)
# ----------------------------------------------------------------------------
def _resblock_kernel(xu_ref, xs_ref, w1_ref, b1_ref, w2_ref, b2_ref,
                     w3_ref, b3_ref, o_ref, hp_ref, *, neg):
    S = xu_ref.shape[1]
    T = xu_ref.shape[2]
    C = xu_ref.shape[3]
    M = w2_ref.shape[0]
    wdt = w1_ref.dtype

    xu = xu_ref[0].reshape(S * T, C)
    xs = xs_ref[0].reshape(S * T, C)
    xc = jnp.concatenate([xu, xs], axis=-1)            # fused torch.cat(dim=1)

    h1 = jnp.dot(xc.astype(wdt), w1_ref[...], preferred_element_type=jnp.float32)
    h1 = h1 + b1_ref[...]
    h1 = jnp.where(h1 >= 0, h1, h1 * neg)
    h2 = jnp.dot(h1.astype(wdt), w2_ref[...], preferred_element_type=jnp.float32)
    h2 = h2 + b2_ref[...]
    h2 = jnp.where(h2 >= 0, h2, h2 * neg)              # (S*T, M)

    # 3x3 conv, pad=1: write h2 into a zero-bordered VMEM scratch, then one
    # im2col matmul with the taps folded into K = 9*M.
    hp_ref[...] = jnp.zeros((S + 2, T + 2, M), jnp.float32)
    hp_ref[1:S + 1, 1:T + 1, :] = h2.reshape(S, T, M)
    hp = hp_ref[...]
    cols = []
    for ky in range(3):
        for kx in range(3):
            cols.append(hp[ky:ky + S, kx:kx + T, :].reshape(S * T, M))
    slab = jnp.concatenate(cols, axis=-1)              # (S*T, 9M)
    out = jnp.dot(slab.astype(wdt), w3_ref[...], preferred_element_type=jnp.float32)
    out = out + b3_ref[...]
    o_ref[0] = jnp.where(out >= 0, out, out * neg)


# ----------------------------------------------------------------------------
# Weight preprocessing: ConvTranspose2d -> combined sub-pixel weight
# ----------------------------------------------------------------------------
def _build_subpixel_weight(wt):
    """wt: PyTorch ConvTranspose2d weight (Cin, Cout, 4, 4) with stride 2, pad 1.

    Returns a (9*Cin, 4*Cout) matrix so that the 3x3-window im2col of the
    (padded-by-1) input times this matrix yields the four output phases
    [(0,0),(0,1),(1,0),(1,1)] packed along columns (Cout each)."""
    Cin, Cout = wt.shape[0], wt.shape[1]
    wf = jnp.flip(wt, axis=(2, 3)).transpose(2, 3, 0, 1)   # (4,4,Cin,Cout)
    zero = jnp.zeros((Cin, Cout), wt.dtype)
    rows = []
    for dy in range(3):
        cols = []
        for dx in range(3):
            blocks = []
            for py in range(2):
                for px in range(2):
                    ky, kx = 2 * dy - py, 2 * dx - px
                    if 0 <= ky < 4 and 0 <= kx < 4:
                        blocks.append(wf[ky, kx])
                    else:
                        blocks.append(zero)
            cols.append(jnp.concatenate(blocks, axis=-1))   # (Cin, 4*Cout)
        rows.append(jnp.stack(cols, axis=0))                # (3, Cin, 4*Cout)
    wc = jnp.stack(rows, axis=0)                            # (3, 3, Cin, 4*Cout)
    return wc.reshape(9 * Cin, 4 * Cout)


# ----------------------------------------------------------------------------
# Forward (2 pallas_calls)
# ----------------------------------------------------------------------------
def up_forward(params, x, x_skip, *, num_groups=GN_GROUPS, eps=GN_EPS,
               neg=NEG_SLOPE, compute_dtype=jnp.float32):
    N, H, W, Cin = x.shape
    S, T = 2 * H, 2 * W
    assert Cin % num_groups == 0, "GroupNorm requires in_ch % 32 == 0"
    G = num_groups
    Cg = Cin // G
    m_ch = params["c1_b"].shape[0]
    out_ch = params["c3_b"].shape[0]

    # ---- stage 1: ConvTranspose2d (sub-pixel) + GroupNorm + LeakyReLU -------
    wc = _build_subpixel_weight(params["u_w"]).astype(compute_dtype)  # (9Cin,4Cin)
    b4 = jnp.tile(params["u_b"], 4).reshape(1, 4 * Cin).astype(jnp.float32)
    g4 = jnp.tile(params["gn_gamma"], 4).reshape(1, 4 * Cin).astype(jnp.float32)
    be4 = jnp.tile(params["gn_beta"], 4).reshape(1, 4 * Cin).astype(jnp.float32)
    m4 = ((jnp.arange(4 * Cin) % Cin)[:, None] // Cg
          == jnp.arange(G)[None, :]).astype(jnp.float32)              # (4Cin, G)

    xp = jnp.pad(x, ((0, 0), (1, 1), (1, 1), (0, 0)))
    k1 = functools.partial(_deconv_gn_lrelu_kernel,
                           cnt=float(S * T * Cg), eps=eps, neg=neg)
    y = pl.pallas_call(
        k1,
        out_shape=jax.ShapeDtypeStruct((N, H, 2, W, 2 * Cin), jnp.float32),
        grid=(N,),
        in_specs=[
            pl.BlockSpec((1, H + 2, W + 2, Cin), lambda n: (n, 0, 0, 0)),
            pl.BlockSpec((9 * Cin, 4 * Cin), lambda n: (0, 0)),
            pl.BlockSpec((1, 4 * Cin), lambda n: (0, 0)),
            pl.BlockSpec((1, 4 * Cin), lambda n: (0, 0)),
            pl.BlockSpec((1, 4 * Cin), lambda n: (0, 0)),
            pl.BlockSpec((4 * Cin, G), lambda n: (0, 0)),
            pl.BlockSpec((G, 4 * Cin), lambda n: (0, 0)),
        ],
        out_specs=pl.BlockSpec((1, H, 2, W, 2 * Cin),
                               lambda n: (n, 0, 0, 0, 0)),
        compiler_params=pltpu.CompilerParams(
            dimension_semantics=("parallel",),
            vmem_limit_bytes=_VMEM_LIMIT),
    )(xp, wc, b4, g4, be4, m4, m4.T)
    # (N, H, 2, W, 2, Cin) row-major == NHWC of the upsampled image -> free reshape.
    x_up = y.reshape(N, S, T, Cin)

    # ---- stage 2: concat + ResBlock (Res_bool=False -> residual path only) ---
    w1 = params["c1_w"].reshape(2 * Cin, m_ch).astype(compute_dtype)
    b1 = params["c1_b"].reshape(1, m_ch).astype(jnp.float32)
    w2 = params["c2_w"].reshape(m_ch, m_ch).astype(compute_dtype)
    b2 = params["c2_b"].reshape(1, m_ch).astype(jnp.float32)
    w3 = params["c3_w"].reshape(9 * m_ch, out_ch).astype(compute_dtype)
    b3 = params["c3_b"].reshape(1, out_ch).astype(jnp.float32)

    k2 = functools.partial(_resblock_kernel, neg=neg)
    out = pl.pallas_call(
        k2,
        out_shape=jax.ShapeDtypeStruct((N, S * T, out_ch), jnp.float32),
        grid=(N,),
        in_specs=[
            pl.BlockSpec((1, S, T, Cin), lambda n: (n, 0, 0, 0)),
            pl.BlockSpec((1, S, T, Cin), lambda n: (n, 0, 0, 0)),
            pl.BlockSpec((2 * Cin, m_ch), lambda n: (0, 0)),
            pl.BlockSpec((1, m_ch), lambda n: (0, 0)),
            pl.BlockSpec((m_ch, m_ch), lambda n: (0, 0)),
            pl.BlockSpec((1, m_ch), lambda n: (0, 0)),
            pl.BlockSpec((9 * m_ch, out_ch), lambda n: (0, 0)),
            pl.BlockSpec((1, out_ch), lambda n: (0, 0)),
        ],
        out_specs=pl.BlockSpec((1, S * T, out_ch), lambda n: (n, 0, 0)),
        scratch_shapes=[pltpu.VMEM((S + 2, T + 2, m_ch), jnp.float32)],
        compiler_params=pltpu.CompilerParams(
            dimension_semantics=("parallel",),
            vmem_limit_bytes=_VMEM_LIMIT),
    )(x_up, x_skip, w1, b1, w2, b2, w3, b3)
    return out.reshape(N, S, T, out_ch)


# ----------------------------------------------------------------------------
# Pure-JAX reference (independent ConvTranspose lowering via lhs_dilation)
# ----------------------------------------------------------------------------
def _ref_conv(x, w, b, *, padding=0, neg=None):
    y = jax.lax.conv_general_dilated(
        x, w, (1, 1), [(padding, padding), (padding, padding)],
        dimension_numbers=("NHWC", "HWIO", "NHWC"),
        precision=jax.lax.Precision.HIGHEST)
    y = y + b.reshape(1, 1, 1, -1)
    return y if neg is None else jnp.where(y >= 0, y, y * neg)


def _ref_conv_transpose(x, wt, b, *, stride=2, padding=1):
    w = jnp.flip(wt, axis=(2, 3)).transpose(2, 3, 0, 1)   # HWIO (flipped)
    k = wt.shape[2]
    p = k - 1 - padding
    y = jax.lax.conv_general_dilated(
        x, w, (1, 1), [(p, p), (p, p)], lhs_dilation=(stride, stride),
        dimension_numbers=("NHWC", "HWIO", "NHWC"),
        precision=jax.lax.Precision.HIGHEST)
    return y + b.reshape(1, 1, 1, -1)


def _ref_gn(x, gamma, beta, G=GN_GROUPS, eps=GN_EPS, neg=NEG_SLOPE):
    N, H, W, C = x.shape
    Cg = C // G
    xr = x.reshape(N, H * W, G, Cg)
    mean = xr.mean(axis=(1, 3), keepdims=True)
    var = ((xr - mean) ** 2).mean(axis=(1, 3), keepdims=True)
    y = ((xr - mean) / jnp.sqrt(var + eps)).reshape(N, H, W, C)
    y = y * gamma.reshape(1, 1, 1, C) + beta.reshape(1, 1, 1, C)
    return jnp.where(y >= 0, y, y * neg)


def up_forward_ref(params, x, x_skip):
    x_up = _ref_conv_transpose(x, params["u_w"], params["u_b"])
    x_up = _ref_gn(x_up, params["gn_gamma"], params["gn_beta"])
    xc = jnp.concatenate([x_up, x_skip], axis=-1)
    h = _ref_conv(xc, params["c1_w"], params["c1_b"], neg=NEG_SLOPE)
    h = _ref_conv(h, params["c2_w"], params["c2_b"], neg=NEG_SLOPE)
    return _ref_conv(h, params["c3_w"], params["c3_b"], padding=1, neg=NEG_SLOPE)


# ----------------------------------------------------------------------------
def init_params(key, in_ch, m_ch, out_ch, k=4):
    ks = jax.random.split(key, 12)
    return {
        # ConvTranspose2d(in_ch, in_ch, 4, s=2, p=1): torch weight (Cin, Cout, k, k)
        "u_w": 0.05 * jax.random.normal(ks[0], (in_ch, in_ch, k, k), jnp.float32),
        "u_b": 0.01 * jax.random.normal(ks[1], (in_ch,), jnp.float32),
        # GroupNorm(32, in_ch)
        "gn_gamma": 1.0 + 0.1 * jax.random.normal(ks[2], (in_ch,), jnp.float32),
        "gn_beta": 0.1 * jax.random.normal(ks[3], (in_ch,), jnp.float32),
        # ResBlock convs, HWIO layout
        "c1_w": 0.05 * jax.random.normal(ks[4], (1, 1, 2 * in_ch, m_ch), jnp.float32),
        "c1_b": 0.01 * jax.random.normal(ks[5], (m_ch,), jnp.float32),
        "c2_w": 0.05 * jax.random.normal(ks[6], (1, 1, m_ch, m_ch), jnp.float32),
        "c2_b": 0.01 * jax.random.normal(ks[7], (m_ch,), jnp.float32),
        "c3_w": 0.05 * jax.random.normal(ks[8], (3, 3, m_ch, out_ch), jnp.float32),
        "c3_b": 0.01 * jax.random.normal(ks[9], (out_ch,), jnp.float32),
        # TODO(synk): ResBlock.cnn_skip exists in __init__ but is unused when
        # Res_bool=False, so its parameters are intentionally omitted.
    }


if __name__ == "__main__":
    in_ch, m_ch, out_ch = 32, 16, 32   # in_ch must be divisible by 32 (GroupNorm)
    N, H, W = 2, 8, 8

    key = jax.random.PRNGKey(0)
    k_x, k_skip, k_p = jax.random.split(key, 3)
    x = jax.random.normal(k_x, (N, H, W, in_ch), jnp.float32)          # NHWC
    x_skip = jax.random.normal(k_skip, (N, 2 * H, 2 * W, in_ch), jnp.float32)
    params = init_params(k_p, in_ch, m_ch, out_ch)

    ref = jax.block_until_ready(up_forward_ref(params, x, x_skip))

    # f32 path (reference uses HIGHEST precision; tolerance kept moderately
    # loose to stay robust to per-generation MXU f32 multi-pass differences).
    out = jax.block_until_ready(up_forward(params, x, x_skip))
    assert out.shape == (N, 2 * H, 2 * W, out_ch), out.shape
    np.testing.assert_allclose(np.asarray(out), np.asarray(ref),
                               rtol=1e-2, atol=1e-3)

    # bf16 matmul-operand path (f32 accumulation, f32 GroupNorm stats).
    out_bf16 = jax.block_until_ready(
        up_forward(params, x, x_skip, compute_dtype=jnp.bfloat16))
    np.testing.assert_allclose(np.asarray(out_bf16), np.asarray(ref),
                               rtol=5e-2, atol=5e-3)

    print("KERNEL_OK")
</pallas_src>

<mosaic_0001>
module attributes {stable_mosaic.version = 11 : i64} {
  func.func @_deconv_gn_lrelu_kernel(%arg0: i32, %arg1: memref<1x10x10x32xf32, #tpu.memory_space<vmem>>, %arg2: memref<288x128xf32, #tpu.memory_space<vmem>>, %arg3: memref<1x128xf32, #tpu.memory_space<vmem>>, %arg4: memref<1x128xf32, #tpu.memory_space<vmem>>, %arg5: memref<1x128xf32, #tpu.memory_space<vmem>>, %arg6: memref<128x32xf32, #tpu.memory_space<vmem>>, %arg7: memref<32x128xf32, #tpu.memory_space<vmem>>, %arg8: memref<1x8x2x8x64xf32, #tpu.memory_space<vmem>>) attributes {dimension_semantics = [#tpu.dimension_semantics<parallel>], iteration_bounds = array<i64: 2>, scalar_prefetch = 0 : i64, scratch_operands = 0 : i64, tpu.core_type = #tpu.core_type<tc>, window_params = [{transform_indices = @transform_0, window_bounds = array<i64: 1, 10, 10, 32>}, {pipeline_mode = #tpu.pipeline_mode<synchronous>, transform_indices = @transform_1, window_bounds = array<i64: 288, 128>}, {pipeline_mode = #tpu.pipeline_mode<synchronous>, transform_indices = @transform_2, window_bounds = array<i64: 1, 128>}, {pipeline_mode = #tpu.pipeline_mode<synchronous>, transform_indices = @transform_3, window_bounds = array<i64: 1, 128>}, {pipeline_mode = #tpu.pipeline_mode<synchronous>, transform_indices = @transform_4, window_bounds = array<i64: 1, 128>}, {pipeline_mode = #tpu.pipeline_mode<synchronous>, transform_indices = @transform_5, window_bounds = array<i64: 128, 32>}, {pipeline_mode = #tpu.pipeline_mode<synchronous>, transform_indices = @transform_6, window_bounds = array<i64: 32, 128>}, {transform_indices = @transform_7, window_bounds = array<i64: 1, 8, 2, 8, 64>}]} {
    %c0 = arith.constant 0 : index
    %c0_0 = arith.constant 0 : index
    %c0_1 = arith.constant 0 : index
    %c0_2 = arith.constant 0 : index
    %0 = vector.load %arg1[%c0, %c0_0, %c0_1, %c0_2] : memref<1x10x10x32xf32, #tpu.memory_space<vmem>>, vector<1x10x10x32xf32>
    %1 = vector.shape_cast %0 : vector<1x10x10x32xf32> to vector<10x10x32xf32>
    %2 = vector.extract_strided_slice %1 {offsets = [0, 0, 0], sizes = [8, 8, 32], strides = [1, 1, 1]} : vector<10x10x32xf32> to vector<8x8x32xf32>
    %3 = vector.shape_cast %2 : vector<8x8x32xf32> to vector<64x32xf32>
    %4 = vector.extract_strided_slice %1 {offsets = [0, 1, 0], sizes = [8, 8, 32], strides = [1, 1, 1]} : vector<10x10x32xf32> to vector<8x8x32xf32>
    %5 = vector.shape_cast %4 : vector<8x8x32xf32> to vector<64x32xf32>
    %6 = vector.extract_strided_slice %1 {offsets = [0, 2, 0], sizes = [8, 8, 32], strides = [1, 1, 1]} : vector<10x10x32xf32> to vector<8x8x32xf32>
    %7 = vector.shape_cast %6 : vector<8x8x32xf32> to vector<64x32xf32>
    %8 = vector.extract_strided_slice %1 {offsets = [1, 0, 0], sizes = [8, 8, 32], strides = [1, 1, 1]} : vector<10x10x32xf32> to vector<8x8x32xf32>
    %9 = vector.shape_cast %8 : vector<8x8x32xf32> to vector<64x32xf32>
    %10 = vector.extract_strided_slice %1 {offsets = [1, 1, 0], sizes = [8, 8, 32], strides = [1, 1, 1]} : vector<10x10x32xf32> to vector<8x8x32xf32>
    %11 = vector.shape_cast %10 : vector<8x8x32xf32> to vector<64x32xf32>
    %12 = vector.extract_strided_slice %1 {offsets = [1, 2, 0], sizes = [8, 8, 32], strides = [1, 1, 1]} : vector<10x10x32xf32> to vector<8x8x32xf32>
    %13 = vector.shape_cast %12 : vector<8x8x32xf32> to vector<64x32xf32>
    %14 = vector.extract_strided_slice %1 {offsets = [2, 0, 0], sizes = [8, 8, 32], strides = [1, 1, 1]} : vector<10x10x32xf32> to vector<8x8x32xf32>
    %15 = vector.shape_cast %14 : vector<8x8x32xf32> to vector<64x32xf32>
    %16 = vector.extract_strided_slice %1 {offsets = [2, 1, 0], sizes = [8, 8, 32], strides = [1, 1, 1]} : vector<10x10x32xf32> to vector<8x8x32xf32>
    %17 = vector.shape_cast %16 : vector<8x8x32xf32> to vector<64x32xf32>
    %18 = vector.extract_strided_slice %1 {offsets = [2, 2, 0], sizes = [8, 8, 32], strides = [1, 1, 1]} : vector<10x10x32xf32> to vector<8x8x32xf32>
    %19 = vector.shape_cast %18 : vector<8x8x32xf32> to vector<64x32xf32>
    %20 = tpu.concatenate %3, %5, %7, %9, %11, %13, %15, %17, %19 in 1 : vector<64x32xf32>, vector<64x32xf32>, vector<64x32xf32>, vector<64x32xf32>, vector<64x32xf32>, vector<64x32xf32>, vector<64x32xf32>, vector<64x32xf32>, vector<64x32xf32> -> vector<64x288xf32>
    %c0_3 = arith.constant 0 : index
    %c0_4 = arith.constant 0 : index
    %21 = vector.load %arg2[%c0_3, %c0_4] : memref<288x128xf32, #tpu.memory_space<vmem>>, vector<288x128xf32>
    %cst = arith.constant dense<0.000000e+00> : vector<64x128xf32>
    %22 = tpu.matmul %20, %21, %cst {dimension_numbers = #tpu.dot_dimension_numbers<[1], [0], [0], [1], [0, 0, 1, 1], [], []>} : vector<64x288xf32>, vector<288x128xf32>, vector<64x128xf32> -> vector<64x128xf32>
    %c0_5 = arith.constant 0 : index
    %c0_6 = arith.constant 0 : index
    %23 = vector.load %arg3[%c0_5, %c0_6] : memref<1x128xf32, #tpu.memory_space<vmem>>, vector<1x128xf32>
    %24 = vector.broadcast %23 : vector<1x128xf32> to vector<64x128xf32>
    %25 = arith.addf %22, %24 : vector<64x128xf32>
    %cst_7 = arith.constant dense<0.000000e+00> : vector<128xf32>
    %26 = vector.multi_reduction <add>, %25, %cst_7 [0] : vector<64x128xf32> to vector<128xf32>
    %27 = vector.shape_cast %26 : vector<128xf32> to vector<1x128xf32>
    %c0_8 = arith.constant 0 : index
    %c0_9 = arith.constant 0 : index
    %28 = vector.load %arg6[%c0_8, %c0_9] : memref<128x32xf32, #tpu.memory_space<vmem>>, vector<128x32xf32>
    %cst_10 = arith.constant dense<0.000000e+00> : vector<1x32xf32>
    %29 = tpu.matmul %27, %28, %cst_10 {dimension_numbers = #tpu.dot_dimension_numbers<[1], [0], [0], [1], [0, 0, 1, 1], [], []>} : vector<1x128xf32>, vector<128x32xf32>, vector<1x32xf32> -> vector<1x32xf32>
    %cst_11 = arith.constant 3.906250e-03 : f32
    %30 = vector.broadcast %cst_11 : f32 to vector<1x32xf32>
    %31 = arith.mulf %29, %30 : vector<1x32xf32>
    %c0_12 = arith.constant 0 : index
    %c0_13 = arith.constant 0 : index
    %32 = vector.load %arg7[%c0_12, %c0_13] : memref<32x128xf32, #tpu.memory_space<vmem>>, vector<32x128xf32>
    %cst_14 = arith.constant dense<0.000000e+00> : vector<1x128xf32>
    %33 = tpu.matmul %31, %32, %cst_14 {dimension_numbers = #tpu.dot_dimension_numbers<[1], [0], [0], [1], [0, 0, 1, 1], [], []>} : vector<1x32xf32>, vector<32x128xf32>, vector<1x128xf32> -> vector<1x128xf32>
    %34 = vector.broadcast %33 : vector<1x128xf32> to vector<64x128xf32>
    %35 = arith.subf %25, %34 : vector<64x128xf32>
    %36 = arith.mulf %35, %35 : vector<64x128xf32>
    %cst_15 = arith.constant dense<0.000000e+00> : vector<128xf32>
    %37 = vector.multi_reduction <add>, %36, %cst_15 [0] : vector<64x128xf32> to vector<128xf32>
    %38 = vector.shape_cast %37 : vector<128xf32> to vector<1x128xf32>
    %c0_16 = arith.constant 0 : index
    %c0_17 = arith.constant 0 : index
    %39 = vector.load %arg6[%c0_16, %c0_17] : memref<128x32xf32, #tpu.memory_space<vmem>>, vector<128x32xf32>
    %cst_18 = arith.constant dense<0.000000e+00> : vector<1x32xf32>
    %40 = tpu.matmul %38, %39, %cst_18 {dimension_numbers = #tpu.dot_dimension_numbers<[1], [0], [0], [1], [0, 0, 1, 1], [], []>} : vector<1x128xf32>, vector<128x32xf32>, vector<1x32xf32> -> vector<1x32xf32>
    %cst_19 = arith.constant 3.906250e-03 : f32
    %41 = vector.broadcast %cst_19 : f32 to vector<1x32xf32>
    %42 = arith.mulf %40, %41 : vector<1x32xf32>
    %c0_20 = arith.constant 0 : index
    %c0_21 = arith.constant 0 : index
    %43 = vector.load %arg7[%c0_20, %c0_21] : memref<32x128xf32, #tpu.memory_space<vmem>>, vector<32x128xf32>
    %cst_22 = arith.constant dense<0.000000e+00> : vector<1x128xf32>
    %44 = tpu.matmul %42, %43, %cst_22 {dimension_numbers = #tpu.dot_dimension_numbers<[1], [0], [0], [1], [0, 0, 1, 1], [], []>} : vector<1x32xf32>, vector<32x128xf32>, vector<1x128xf32> -> vector<1x128xf32>
    %cst_23 = arith.constant 9.99999974E-6 : f32
    %45 = vector.broadcast %cst_23 : f32 to vector<1x128xf32>
    %46 = arith.addf %44, %45 : vector<1x128xf32>
    %47 = math.rsqrt %46 : vector<1x128xf32>
    %48 = vector.broadcast %47 : vector<1x128xf32> to vector<64x128xf32>
    %49 = arith.mulf %35, %48 : vector<64x128xf32>
    %c0_24 = arith.constant 0 : index
    %c0_25 = arith.constant 0 : index
    %50 = vector.load %arg4[%c0_24, %c0_25] : memref<1x128xf32, #tpu.memory_space<vmem>>, vector<1x128xf32>
    %51 = vector.broadcast %50 : vector<1x128xf32> to vector<64x128xf32>
    %52 = arith.mulf %49, %51 : vector<64x128xf32>
    %c0_26 = arith.constant 0 : index
    %c0_27 = arith.constant 0 : index
    %53 = vector.load %arg5[%c0_26, %c0_27] : memref<1x128xf32, #tpu.memory_space<vmem>>, vector<1x128xf32>
    %54 = vector.broadcast %53 : vector<1x128xf32> to vector<64x128xf32>
    %55 = arith.addf %52, %54 : vector<64x128xf32>
    %cst_28 = arith.constant 0.000000e+00 : f32
    %56 = vector.broadcast %cst_28 : f32 to vector<64x128xf32>
    %57 = arith.cmpf oge, %55, %56 : vector<64x128xf32>
    %cst_29 = arith.constant 1.000000e-01 : f32
    %58 = vector.broadcast %cst_29 : f32 to vector<64x128xf32>
    %59 = arith.mulf %55, %58 : vector<64x128xf32>
    %60 = arith.select %57, %55, %59 : vector<64x128xi1>, vector<64x128xf32>
    %61 = vector.extract_strided_slice %60 {offsets = [0, 0], sizes = [64, 64], strides = [1, 1]} : vector<64x128xf32> to vector<64x64xf32>
    %62 = vector.shape_cast %61 : vector<64x64xf32> to vector<8x8x64xf32>
    %c0_30 = arith.constant 0 : index
    %c0_31 = arith.constant 0 : index
    %c0_32 = arith.constant 0 : index
    %c0_33 = arith.constant 0 : index
    %c0_34 = arith.constant 0 : index
    %63 = vector.load %arg8[%c0_30, %c0_31, %c0_32, %c0_33, %c0_34] : memref<1x8x2x8x64xf32, #tpu.memory_space<vmem>>, vector<1x8x1x8x64xf32>
    %64 = vector.shape_cast %63 : vector<1x8x1x8x64xf32> to vector<8x8x64xf32>
    %65 = vector.shape_cast %62 : vector<8x8x64xf32> to vector<1x8x1x8x64xf32>
    tpu.vector_store %arg8[%c0_30, %c0_31, %c0_32, %c0_33, %c0_34], %65 {strides = array<i32>} : memref<1x8x2x8x64xf32, #tpu.memory_space<vmem>>, vector<1x8x1x8x64xf32>,
    %66 = vector.extract_strided_slice %60 {offsets = [0, 64], sizes = [64, 64], strides = [1, 1]} : vector<64x128xf32> to vector<64x64xf32>
    %67 = vector.shape_cast %66 : vector<64x64xf32> to vector<8x8x64xf32>
    %c0_35 = arith.constant 0 : index
    %c0_36 = arith.constant 0 : index
    %c1 = arith.constant 1 : index
    %c0_37 = arith.constant 0 : index
    %c0_38 = arith.constant 0 : index
    %68 = vector.load %arg8[%c0_35, %c0_36, %c1, %c0_37, %c0_38] : memref<1x8x2x8x64xf32, #tpu.memory_space<vmem>>, vector<1x8x1x8x64xf32>
    %69 = vector.shape_cast %68 : vector<1x8x1x8x64xf32> to vector<8x8x64xf32>
    %70 = vector.shape_cast %67 : vector<8x8x64xf32> to vector<1x8x1x8x64xf32>
    tpu.vector_store %arg8[%c0_35, %c0_36, %c1, %c0_37, %c0_38], %70 {strides = array<i32>} : memref<1x8x2x8x64xf32, #tpu.memory_space<vmem>>, vector<1x8x1x8x64xf32>,
    return
  }
  func.func @transform_0(%arg0: i32) -> (i32, i32, i32, i32) {
    %c0_i32 = arith.constant 0 : i32
    %c0_i32_0 = arith.constant 0 : i32
    %c0_i32_1 = arith.constant 0 : i32
    %c0_i32_2 = arith.constant 0 : i32
    return %arg0, %c0_i32, %c0_i32_0, %c0_i32_1 : i32, i32, i32, i32
  }
  func.func @transform_1(%arg0: i32) -> (i32, i32) {
    %c0_i32 = arith.constant 0 : i32
    %c0_i32_0 = arith.constant 0 : i32
    %c0_i32_1 = arith.constant 0 : i32
    return %c0_i32, %c0_i32_0 : i32, i32
  }
  func.func @transform_2(%arg0: i32) -> (i32, i32) {
    %c0_i32 = arith.constant 0 : i32
    %c0_i32_0 = arith.constant 0 : i32
    %c0_i32_1 = arith.constant 0 : i32
    return %c0_i32, %c0_i32_0 : i32, i32
  }
  func.func @transform_3(%arg0: i32) -> (i32, i32) {
    %c0_i32 = arith.constant 0 : i32
    %c0_i32_0 = arith.constant 0 : i32
    %c0_i32_1 = arith.constant 0 : i32
    return %c0_i32, %c0_i32_0 : i32, i32
  }
  func.func @transform_4(%arg0: i32) -> (i32, i32) {
    %c0_i32 = arith.constant 0 : i32
    %c0_i32_0 = arith.constant 0 : i32
    %c0_i32_1 = arith.constant 0 : i32
    return %c0_i32, %c0_i32_0 : i32, i32
  }
  func.func @transform_5(%arg0: i32) -> (i32, i32) {
    %c0_i32 = arith.constant 0 : i32
    %c0_i32_0 = arith.constant 0 : i32
    %c0_i32_1 = arith.constant 0 : i32
    return %c0_i32, %c0_i32_0 : i32, i32
  }
  func.func @transform_6(%arg0: i32) -> (i32, i32) {
    %c0_i32 = arith.constant 0 : i32
    %c0_i32_0 = arith.constant 0 : i32
    %c0_i32_1 = arith.constant 0 : i32
    return %c0_i32, %c0_i32_0 : i32, i32
  }
  func.func @transform_7(%arg0: i32) -> (i32, i32, i32, i32, i32) {
    %c0_i32 = arith.constant 0 : i32
    %c0_i32_0 = arith.constant 0 : i32
    %c0_i32_1 = arith.constant 0 : i32
    %c0_i32_2 = arith.constant 0 : i32
    %c0_i32_3 = arith.constant 0 : i32
    return %arg0, %c0_i32, %c0_i32_0, %c0_i32_1, %c0_i32_2 : i32, i32, i32, i32, i32
  }
}

</mosaic_0001>

<llo_original>
// kernel: tpu_custom_call.1
$region0: #{tpu_custom_call.1}
  #allocation0 [shape = 'u32[]', space=smem, size = 0x4, offset = 0x4, fixed_abs, tag = 'smem constant byte address 0x4 - core index']
  #allocation1 [shape = 'u32[72,128]{1,0:T(1,128)}', space=vmem, size = 0x9000, scoped, tag = 'internal scratch']
  %s0 = inlined_call_operand.vmem [shape: f32[2,10,10,32], index: 0, kind: input, shape index: {}]
  %s1 = inlined_call_operand.vmem [shape: f32[288,128], index: 1, kind: input, shape index: {}]
  %s2 = inlined_call_operand.vmem [shape: f32[1,128], index: 2, kind: input, shape index: {}]
  %s3 = inlined_call_operand.vmem [shape: f32[1,128], index: 3, kind: input, shape index: {}]
  %s4 = inlined_call_operand.vmem [shape: f32[1,128], index: 4, kind: input, shape index: {}]
  %s5 = inlined_call_operand.vmem [shape: f32[128,32], index: 5, kind: input, shape index: {}]
  %s6 = inlined_call_operand.vmem [shape: f32[32,128], index: 6, kind: input, shape index: {}]
  %s7 = inlined_call_operand.hbm [shape: f32[2,8,2,8,64], index: 7, kind: output, shape index: {}]
  %s8 = sld [smem:[#allocation0]]
  $region61: #{tpu_custom_call.1} parent=0
    _
  %s10 = ssub.s32 1, %s8
  %s11 = scalar_select 0, %s10, %s8
  $region1: #{tpu_custom_call.1} parent=0
    #allocation2 [shape = 'u8[131072]{0}', space=vmem, size = 0x20000, scoped, tag = 'output window, operand 0']
    #allocation3 [shape = 's32[2]{0}', space=sflag, size = 0x8, scoped, tag = 'scoped memory for tpu_custom_call.1']
    %12 = vsyncpa [#allocation3], 0
    %s13 = scalar_lea.sflag [#allocation3], 1
    %14 = vsyncpa %s13, 0
    loop: start=0, step=1, limit=4
    $region2: #{tpu_custom_call.1} parent=1 // loop_pre_header
      _
    $region3: #{tpu_custom_call.1} parent=1 // loop_header
      %s16 = sphi 0, %s20
      %p17 = scmp.ge.s32.totalorder %s16, 4
      %s26 = sphi 0, %s28
      %s29 = sphi 0, %s26
      %s30 = sphi 0, %s29
      %s46 = sphi 0, %s30
      %s50 = sphi 0, %s50
      %s52 = sphi 0, %s50
      %s53 = sphi 0, %s52
      %s67 = sphi 0, %s53
      %s71 = sphi 0, %s71
      %s73 = sphi 0, %s71
      %s74 = sphi 0, %s73
      %s88 = sphi 0, %s74
      %s92 = sphi 0, %s92
      %s94 = sphi 0, %s92
      %s95 = sphi 0, %s94
      %s109 = sphi 0, %s95
      %s113 = sphi 0, %s113
      %s115 = sphi 0, %s113
      %s116 = sphi 0, %s115
      %s130 = sphi 0, %s116
      %s134 = sphi 0, %s134
      %s136 = sphi 0, %s134
      %s137 = sphi 0, %s136
      %s151 = sphi 0, %s137
      %s155 = sphi 0, %s155
      %s157 = sphi 0, %s155
      %s158 = sphi 0, %s157
      %s172 = sphi 0, %s158
      %s178 = sphi 0, %s180
      %s181 = sphi 0, %s178
      %s182 = sphi 0, %s181
      %s198 = sphi 0, %s182
    $region4: #{tpu_custom_call.1} parent=1 // loop_header_branch
      %19 = sbr.rel (%p17) target = $region8
    $region5: #{tpu_custom_call.1} parent=1 // loop_body
      %s21 = ssub.s32 %s16, 1
      %s22 = ssub.s32 %s16, 2
      %s23 = sadd.s32 %s16, 1
      %s24 = ssub.s32 %s16, %s23
      %p25 = scmp.eq.s32.totalorder %s24, 0
      %s27 = sadd.s32 %s26, 1
      %s28 = scalar_select %p25, %s26, %s27
      %p31 = pneg %p25
      %p32 = scmp.eq.s32.totalorder %s16, 1
      %p33 = por %p31, %p32
      %p34 = scmp.ne.s32.totalorder %s26, %s29
      %p35 = scmp.eq.s32.totalorder %s16, 0
      %p36 = por %p34, %p35
      %p37 = scmp.ne.s32.totalorder %s26, %s29
      %p38 = scmp.eq.s32.totalorder %s21, 1
      %p39 = por %p37, %p38
      %p40 = scmp.ne.s32.totalorder %s29, %s30
      %p41 = scmp.eq.s32.totalorder %s21, 0
      %p42 = por %p40, %p41
      %p43 = scmp.ne.s32.totalorder %s29, %s30
      %p44 = scmp.eq.s32.totalorder %s22, 1
      %p45 = por %p43, %p44
      %p47 = scmp.ne.s32.totalorder %s30, %s46
      %p48 = scmp.eq.s32.totalorder %s22, 0
      %p49 = por %p47, %p48
      %s51 = sadd.s32 %s50, 1
      %p54 = scmp.eq.s32.totalorder %s16, 1
      %p55 = scmp.ne.s32.totalorder %s50, %s52
      %p56 = scmp.eq.s32.totalorder %s16, 0
      %p57 = por %p55, %p56
      %p58 = scmp.ne.s32.totalorder %s50, %s52
      %p59 = scmp.eq.s32.totalorder %s21, 1
      %p60 = por %p58, %p59
      %p61 = scmp.ne.s32.totalorder %s52, %s53
      %p62 = scmp.eq.s32.totalorder %s21, 0
      %p63 = por %p61, %p62
      %p64 = scmp.ne.s32.totalorder %s52, %s53
      %p65 = scmp.eq.s32.totalorder %s22, 1
      %p66 = por %p64, %p65
      %p68 = scmp.ne.s32.totalorder %s53, %s67
      %p69 = scmp.eq.s32.totalorder %s22, 0
      %p70 = por %p68, %p69
      %s72 = sadd.s32 %s71, 1
      %p75 = scmp.eq.s32.totalorder %s16, 1
      %p76 = scmp.ne.s32.totalorder %s71, %s73
      %p77 = scmp.eq.s32.totalorder %s16, 0
      %p78 = por %p76, %p77
      %p79 = scmp.ne.s32.totalorder %s71, %s73
      %p80 = scmp.eq.s32.totalorder %s21, 1
      %p81 = por %p79, %p80
      %p82 = scmp.ne.s32.totalorder %s73, %s74
      %p83 = scmp.eq.s32.totalorder %s21, 0
      %p84 = por %p82, %p83
      %p85 = scmp.ne.s32.totalorder %s73, %s74
      %p86 = scmp.eq.s32.totalorder %s22, 1
      %p87 = por %p85, %p86
      %p89 = scmp.ne.s32.totalorder %s74, %s88
      %p90 = scmp.eq.s32.totalorder %s22, 0
      %p91 = por %p89, %p90
      %s93 = sadd.s32 %s92, 1
      %p96 = scmp.eq.s32.totalorder %s16, 1
      %p97 = scmp.ne.s32.totalorder %s92, %s94
      %p98 = scmp.eq.s32.totalorder %s16, 0
      %p99 = por %p97, %p98
      %p100 = scmp.ne.s32.totalorder %s92, %s94
      %p101 = scmp.eq.s32.totalorder %s21, 1
      %p102 = por %p100, %p101
      %p103 = scmp.ne.s32.totalorder %s94, %s95
      %p104 = scmp.eq.s32.totalorder %s21, 0
      %p105 = por %p103, %p104
      %p106 = scmp.ne.s32.totalorder %s94, %s95
      %p107 = scmp.eq.s32.totalorder %s22, 1
      %p108 = por %p106, %p107
      %p110 = scmp.ne.s32.totalorder %s95, %s109
      %p111 = scmp.eq.s32.totalorder %s22, 0
      %p112 = por %p110, %p111
      %s114 = sadd.s32 %s113, 1
      %p117 = scmp.eq.s32.totalorder %s16, 1
      %p118 = scmp.ne.s32.totalorder %s113, %s115
      %p119 = scmp.eq.s32.totalorder %s16, 0
      %p120 = por %p118, %p119
      %p121 = scmp.ne.s32.totalorder %s113, %s115
      %p122 = scmp.eq.s32.totalorder %s21, 1
      %p123 = por %p121, %p122
      %p124 = scmp.ne.s32.totalorder %s115, %s116
      %p125 = scmp.eq.s32.totalorder %s21, 0
      %p126 = por %p124, %p125
      %p127 = scmp.ne.s32.totalorder %s115, %s116
      %p128 = scmp.eq.s32.totalorder %s22, 1
      %p129 = por %p127, %p128
      %p131 = scmp.ne.s32.totalorder %s116, %s130
      %p132 = scmp.eq.s32.totalorder %s22, 0
      %p133 = por %p131, %p132
      %s135 = sadd.s32 %s134, 1
      %p138 = scmp.eq.s32.totalorder %s16, 1
      %p139 = scmp.ne.s32.totalorder %s134, %s136
      %p140 = scmp.eq.s32.totalorder %s16, 0
      %p141 = por %p139, %p140
      %p142 = scmp.ne.s32.totalorder %s134, %s136
      %p143 = scmp.eq.s32.totalorder %s21, 1
      %p144 = por %p142, %p143
      %p145 = scmp.ne.s32.totalorder %s136, %s137
      %p146 = scmp.eq.s32.totalorder %s21, 0
      %p147 = por %p145, %p146
      %p148 = scmp.ne.s32.totalorder %s136, %s137
      %p149 = scmp.eq.s32.totalorder %s22, 1
      %p150 = por %p148, %p149
      %p152 = scmp.ne.s32.totalorder %s137, %s151
      %p153 = scmp.eq.s32.totalorder %s22, 0
      %p154 = por %p152, %p153
      %s156 = sadd.s32 %s155, 1
      %p159 = scmp.eq.s32.totalorder %s16, 1
      %p160 = scmp.ne.s32.totalorder %s155, %s157
      %p161 = scmp.eq.s32.totalorder %s16, 0
      %p162 = por %p160, %p161
      %p163 = scmp.ne.s32.totalorder %s155, %s157
      %p164 = scmp.eq.s32.totalorder %s21, 1
      %p165 = por %p163, %p164
      %p166 = scmp.ne.s32.totalorder %s157, %s158
      %p167 = scmp.eq.s32.totalorder %s21, 0
      %p168 = por %p166, %p167
      %p169 = scmp.ne.s32.totalorder %s157, %s158
      %p170 = scmp.eq.s32.totalorder %s22, 1
      %p171 = por %p169, %p170
      %p173 = scmp.ne.s32.totalorder %s158, %s172
      %p174 = scmp.eq.s32.totalorder %s22, 0
      %p175 = por %p173, %p174
      %s176 = ssub.s32 %s16, %s23
      %p177 = scmp.eq.s32.totalorder %s176, 0
      %s179 = sadd.s32 %s178, 1
      %s180 = scalar_select %p177, %s178, %s179
      %p183 = pneg %p177
      %p184 = scmp.eq.s32.totalorder %s16, 1
      %p185 = por %p183, %p184
      %p186 = scmp.ne.s32.totalorder %s178, %s181
      %p187 = scmp.eq.s32.totalorder %s16, 0
      %p188 = por %p186, %p187
      %p189 = scmp.ne.s32.totalorder %s178, %s181
      %p190 = scmp.eq.s32.totalorder %s21, 1
      %p191 = por %p189, %p190
      %p192 = scmp.ne.s32.totalorder %s181, %s182
      %p193 = scmp.eq.s32.totalorder %s21, 0
      %p194 = por %p192, %p193
      %p195 = scmp.ne.s32.totalorder %s181, %s182
      %p196 = scmp.eq.s32.totalorder %s22, 1
      %p197 = por %p195, %p196
      %p199 = scmp.ne.s32.totalorder %s182, %s198
      %p200 = scmp.eq.s32.totalorder %s22, 0
      %p201 = por %p199, %p200
      %p202 = scmp.le.s32.totalorder 1, %s16
      %p203 = scmp.lt.s32.totalorder %s16, 3
      %p204 = pnand %p202, %p203
      %p205 = pneg %p204
      // Predicated region
      $region9: #{tpu_custom_call.1} parent=5 // pred_check
        _
      $region10: #{tpu_custom_call.1} parent=5 // pred_check_branch
        %207 = sbr.rel (%p204) target = $region12
      $region11: #{tpu_custom_call.1} parent=5 // pred_region
        %s208 = ssub.s32 %s16, 1
        // Predicated region
        $region13: #{tpu_custom_call.1} parent=11 // pred_check
          %p209 = pneg %p63
        $region14: #{tpu_custom_call.1} parent=11 // pred_check_branch
          %211 = sbr.rel (%p209) target = $region16
        $region15: #{tpu_custom_call.1} parent=11 // pred_region
          _
        $region16: #{tpu_custom_call.1} parent=11 // pred_fallthru
          _
        // Predicated region
        $region17: #{tpu_custom_call.1} parent=11 // pred_check
          %p212 = pneg %p84
        $region18: #{tpu_custom_call.1} parent=11 // pred_check_branch
          %214 = sbr.rel (%p212) target = $region20
        $region19: #{tpu_custom_call.1} parent=11 // pred_region
          _
        $region20: #{tpu_custom_call.1} parent=11 // pred_fallthru
          _
        // Predicated region
        $region21: #{tpu_custom_call.1} parent=11 // pred_check
          %p215 = pneg %p105
        $region22: #{tpu_custom_call.1} parent=11 // pred_check_branch
          %217 = sbr.rel (%p215) target = $region24
        $region23: #{tpu_custom_call.1} parent=11 // pred_region
          _
        $region24: #{tpu_custom_call.1} parent=11 // pred_fallthru
          _
        // Predicated region
        $region25: #{tpu_custom_call.1} parent=11 // pred_check
          %p218 = pneg %p126
        $region26: #{tpu_custom_call.1} parent=11 // pred_check_branch
          %220 = sbr.rel (%p218) target = $region28
        $region27: #{tpu_custom_call.1} parent=11 // pred_region
          _
        $region28: #{tpu_custom_call.1} parent=11 // pred_fallthru
          _
        // Predicated region
        $region29: #{tpu_custom_call.1} parent=11 // pred_check
          %p221 = pneg %p147
        $region30: #{tpu_custom_call.1} parent=11 // pred_check_branch
          %223 = sbr.rel (%p221) target = $region32
        $region31: #{tpu_custom_call.1} parent=11 // pred_region
          _
        $region32: #{tpu_custom_call.1} parent=11 // pred_fallthru
          _
        // Predicated region
        $region33: #{tpu_custom_call.1} parent=11 // pred_check
          %p224 = pneg %p168
        $region34: #{tpu_custom_call.1} parent=11 // pred_check_branch
          %226 = sbr.rel (%p224) target = $region36
        $region35: #{tpu_custom_call.1} parent=11 // pred_region
          _
        $region36: #{tpu_custom_call.1} parent=11 // pred_fallthru
          _
      $region12: #{tpu_custom_call.1} parent=5 // pred_fallthru
        _
      %p227 = scmp.lt.s32.totalorder %s16, 2
      // Predicated region
      $region37: #{tpu_custom_call.1} parent=5 // pred_check
        %p228 = pneg %p227
      $region38: #{tpu_custom_call.1} parent=5 // pred_check_branch
        %230 = sbr.rel (%p228) target = $region40
      $region39: #{tpu_custom_call.1} parent=5 // pred_region
        // Predicated region
        $region41: #{tpu_custom_call.1} parent=39 // pred_check
          %p231 = pneg %p36
        $region42: #{tpu_custom_call.1} parent=39 // pred_check_branch
          %233 = sbr.rel (%p231) target = $region44
        $region43: #{tpu_custom_call.1} parent=39 // pred_region
          %p234 = scmp.lt.s32.totalorder %s16, 1
          %s235 = scalar_select %p234, %s16, 1
          %s236 = smul.addr %s235, 20
          %s237 = smul.addr %s236, 8
          %s238 = scalar_lea.vmem %s0, %s237
        $region44: #{tpu_custom_call.1} parent=39 // pred_fallthru
          _
      $region40: #{tpu_custom_call.1} parent=5 // pred_fallthru
        _
      %p239 = scmp.le.s32.totalorder 1, %s16
      %p240 = scmp.lt.s32.totalorder %s16, 3
      %p241 = pnand %p239, %p240
      %p242 = pneg %p241
      // Predicated region
      $region45: #{tpu_custom_call.1} parent=5 // pred_check
        _
      $region46: #{tpu_custom_call.1} parent=5 // pred_check_branch
        %244 = sbr.rel (%p241) target = $region48
      $region47: #{tpu_custom_call.1} parent=5 // pred_region
        %s245 = ssub.s32 %s16, 1
        %p246 = scmp.lt.s32.totalorder %s21, 1
        %s247 = scalar_select %p246, %s21, 1
        %s248 = smul.addr %s247, 20
        %s249 = smul.addr %s248, 8
        %s250 = scalar_lea.vmem %s0, %s249
        %p251 = pneg %p42
        %p252 = pneg %p39
        %p253 = pneg %p63
        %p254 = pneg %p60
        %p255 = pneg %p84
        %p256 = pneg %p81
        %p257 = pneg %p105
        %p258 = pneg %p102
        %p259 = pneg %p126
        %p260 = pneg %p123
        %p261 = pneg %p147
        %p262 = pneg %p144
        %p263 = pneg %p168
        %p264 = pneg %p165
        %p265 = pneg %p194
        %p266 = pneg %p191
        %s267 = sand.u32 %s181, 1
        %s268 = scalar_lea.sflag [#allocation3], %s267
        %s269 = sand.u32 %s181, 1
        %s270 = smul.addr %s269, 128
        %s271 = scalar_lea.vmem [#allocation2], %s270
        %p272 = scmp.lt.s32.totalorder %s21, 1
        %s273 = scalar_select %p272, %s21, 1
        %s274 = smul.addr %s273, 20
        %s275 = smul.addr %s274, 8
        %s276 = scalar_lea.vmem %s0, %s275
        %v277 = vld [vmem:[%s276] sm:$0xff]
        %v278 = vld [vmem:[%s276 + $0x8] sm:$0x3]
        %v279 = vld [vmem:[%s276 + $0x10] sm:$0xff]
        %v280 = vld [vmem:[%s276 + $0x18] sm:$0x3]
        %v281 = vld [vmem:[%s276 + $0x20] sm:$0xff]
        %v282 = vld [vmem:[%s276 + $0x28] sm:$0x3]
        %v283 = vld [vmem:[%s276 + $0x30] sm:$0xff]
        %v284 = vld [vmem:[%s276 + $0x38] sm:$0x3]
        %v285 = vld [vmem:[%s276 + $0x40] sm:$0xff]
        %v286 = vld [vmem:[%s276 + $0x48] sm:$0x3]
        %v287 = vld [vmem:[%s276 + $0x50] sm:$0xff]
        %v288 = vld [vmem:[%s276 + $0x58] sm:$0x3]
        %v289 = vld [vmem:[%s276 + $0x60] sm:$0xff]
        %v290 = vld [vmem:[%s276 + $0x68] sm:$0x3]
        %v291 = vld [vmem:[%s276 + $0x70] sm:$0xff]
        %v292 = vld [vmem:[%s276 + $0x78] sm:$0x3]
        %v293 = vld [vmem:[%s276 + $0x80] sm:$0xff]
        %v294 = vld [vmem:[%s276 + $0x88] sm:$0x3]
        %v295 = vld [vmem:[%s276 + $0x90] sm:$0xff]
        %v296 = vld [vmem:[%s276 + $0x98] sm:$0x3]
        %vm313 = vcmask 1046528
        %v314 = vrot.slane %v277, 1
        %v315 = vrot.slane %v278, 1
        %v316 = vsel %vm313, %v314, %v315
        %v317 = vrot.slane %v279, 1
        %v318 = vrot.slane %v280, 1
        %v319 = vsel %vm313, %v317, %v318
        %v320 = vrot.slane %v281, 1
        %v321 = vrot.slane %v282, 1
        %v322 = vsel %vm313, %v320, %v321
        %v323 = vrot.slane %v283, 1
        %v324 = vrot.slane %v284, 1
        %v325 = vsel %vm313, %v323, %v324
        %v326 = vrot.slane %v285, 1
        %v327 = vrot.slane %v286, 1
        %v328 = vsel %vm313, %v326, %v327
        %v329 = vrot.slane %v287, 1
        %v330 = vrot.slane %v288, 1
        %v331 = vsel %vm313, %v329, %v330
        %v332 = vrot.slane %v289, 1
        %v333 = vrot.slane %v290, 1
        %v334 = vsel %vm313, %v332, %v333
        %v335 = vrot.slane %v291, 1
        %v336 = vrot.slane %v292, 1
        %v337 = vsel %vm313, %v335, %v336
        %vm338 = vcmask 1045504
        %v339 = vrot.slane %v277, 2
        %v340 = vrot.slane %v278, 2
        %v341 = vsel %vm338, %v339, %v340
        %v342 = vrot.slane %v279, 2
        %v343 = vrot.slane %v280, 2
        %v344 = vsel %vm338, %v342, %v343
        %v345 = vrot.slane %v281, 2
        %v346 = vrot.slane %v282, 2
        %v347 = vsel %vm338, %v345, %v346
        %v348 = vrot.slane %v283, 2
        %v349 = vrot.slane %v284, 2
        %v350 = vsel %vm338, %v348, %v349
        %v351 = vrot.slane %v285, 2
        %v352 = vrot.slane %v286, 2
        %v353 = vsel %vm338, %v351, %v352
        %v354 = vrot.slane %v287, 2
        %v355 = vrot.slane %v288, 2
        %v356 = vsel %vm338, %v354, %v355
        %v357 = vrot.slane %v289, 2
        %v358 = vrot.slane %v290, 2
        %v359 = vsel %vm338, %v357, %v358
        %v360 = vrot.slane %v291, 2
        %v361 = vrot.slane %v292, 2
        %v362 = vsel %vm338, %v360, %v361
        %v365 = vrot.slane %v293, 1
        %v366 = vrot.slane %v294, 1
        %v367 = vsel %vm313, %v365, %v366
        %v376 = vrot.slane %v293, 2
        %v377 = vrot.slane %v294, 2
        %v378 = vsel %vm338, %v376, %v377
        %v381 = vrot.slane %v295, 1
        %v382 = vrot.slane %v296, 1
        %v383 = vsel %vm313, %v381, %v382
        %v384 = vrot.slane %v295, 2
        %v385 = vrot.slane %v296, 2
        %v386 = vsel %vm338, %v384, %v385
        %387 = vrot.lane.b32.xlu0 %v316, 32
        %v388 = vpop.permute.xlu0 %387
        %389 = vrot.lane.b32.xlu0 %v319, 32
        %v390 = vpop.permute.xlu0 %389
        %391 = vrot.lane.b32.xlu0 %v322, 32
        %v392 = vpop.permute.xlu0 %391
        %393 = vrot.lane.b32.xlu0 %v325, 32
        %v394 = vpop.permute.xlu0 %393
        %395 = vrot.lane.b32.xlu0 %v328, 32
        %v396 = vpop.permute.xlu0 %395
        %397 = vrot.lane.b32.xlu0 %v331, 32
        %v398 = vpop.permute.xlu0 %397
        %399 = vrot.lane.b32.xlu0 %v334, 32
        %v400 = vpop.permute.xlu0 %399
        %401 = vrot.lane.b32.xlu0 %v337, 32
        %v402 = vpop.permute.xlu0 %401
        %411 = vrot.lane.b32.xlu0 %v341, 64
        %v412 = vpop.permute.xlu0 %411
        %413 = vrot.lane.b32.xlu0 %v344, 64
        %v414 = vpop.permute.xlu0 %413
        %415 = vrot.lane.b32.xlu0 %v347, 64
        %v416 = vpop.permute.xlu0 %415
        %417 = vrot.lane.b32.xlu0 %v350, 64
        %v418 = vpop.permute.xlu0 %417
        %419 = vrot.lane.b32.xlu0 %v353, 64
        %v420 = vpop.permute.xlu0 %419
        %421 = vrot.lane.b32.xlu0 %v356, 64
        %v422 = vpop.permute.xlu0 %421
        %423 = vrot.lane.b32.xlu0 %v359, 64
        %v424 = vpop.permute.xlu0 %423
        %425 = vrot.lane.b32.xlu0 %v362, 64
        %v426 = vpop.permute.xlu0 %425
        %435 = vrot.lane.b32.xlu0 %v279, 96
        %v436 = vpop.permute.xlu0 %435
        %437 = vrot.lane.b32.xlu0 %v281, 96
        %v438 = vpop.permute.xlu0 %437
        %439 = vrot.lane.b32.xlu0 %v283, 96
        %v440 = vpop.permute.xlu0 %439
        %441 = vrot.lane.b32.xlu0 %v285, 96
        %v442 = vpop.permute.xlu0 %441
        %443 = vrot.lane.b32.xlu0 %v287, 96
        %v444 = vpop.permute.xlu0 %443
        %445 = vrot.lane.b32.xlu0 %v289, 96
        %v446 = vpop.permute.xlu0 %445
        %447 = vrot.lane.b32.xlu0 %v291, 96
        %v448 = vpop.permute.xlu0 %447
        %449 = vrot.lane.b32.xlu0 %v293, 96
        %v450 = vpop.permute.xlu0 %449
        %459 = vrot.lane.b32.xlu0 %v344, 32
        %v460 = vpop.permute.xlu0 %459
        %461 = vrot.lane.b32.xlu0 %v347, 32
        %v462 = vpop.permute.xlu0 %461
        %463 = vrot.lane.b32.xlu0 %v350, 32
        %v464 = vpop.permute.xlu0 %463
        %465 = vrot.lane.b32.xlu0 %v353, 32
        %v466 = vpop.permute.xlu0 %465
        %467 = vrot.lane.b32.xlu0 %v356, 32
        %v468 = vpop.permute.xlu0 %467
        %469 = vrot.lane.b32.xlu0 %v359, 32
        %v470 = vpop.permute.xlu0 %469
        %471 = vrot.lane.b32.xlu0 %v362, 32
        %v472 = vpop.permute.xlu0 %471
        %473 = vrot.lane.b32.xlu0 %v378, 32
        %v474 = vpop.permute.xlu0 %473
        %483 = vrot.lane.b32.xlu0 %v281, 64
        %v484 = vpop.permute.xlu0 %483
        %485 = vrot.lane.b32.xlu0 %v283, 64
        %v486 = vpop.permute.xlu0 %485
        %487 = vrot.lane.b32.xlu0 %v285, 64
        %v488 = vpop.permute.xlu0 %487
        %489 = vrot.lane.b32.xlu0 %v287, 64
        %v490 = vpop.permute.xlu0 %489
        %491 = vrot.lane.b32.xlu0 %v289, 64
        %v492 = vpop.permute.xlu0 %491
        %493 = vrot.lane.b32.xlu0 %v291, 64
        %v494 = vpop.permute.xlu0 %493
        %495 = vrot.lane.b32.xlu0 %v293, 64
        %v496 = vpop.permute.xlu0 %495
        %497 = vrot.lane.b32.xlu0 %v295, 64
        %v498 = vpop.permute.xlu0 %497
        %507 = vrot.lane.b32.xlu0 %v322, 96
        %v508 = vpop.permute.xlu0 %507
        %509 = vrot.lane.b32.xlu0 %v325, 96
        %v510 = vpop.permute.xlu0 %509
        %511 = vrot.lane.b32.xlu0 %v328, 96
        %v512 = vpop.permute.xlu0 %511
        %513 = vrot.lane.b32.xlu0 %v331, 96
        %v514 = vpop.permute.xlu0 %513
        %515 = vrot.lane.b32.xlu0 %v334, 96
        %v516 = vpop.permute.xlu0 %515
        %517 = vrot.lane.b32.xlu0 %v337, 96
        %v518 = vpop.permute.xlu0 %517
        %519 = vrot.lane.b32.xlu0 %v367, 96
        %v520 = vpop.permute.xlu0 %519
        %521 = vrot.lane.b32.xlu0 %v383, 96
        %v522 = vpop.permute.xlu0 %521
        %vm531 = vcmask 261120
        %v532 = vsel %vm531, %v277, %v388
        %v533 = vsel %vm531, %v279, %v390
        %v534 = vsel %vm531, %v281, %v392
        %v535 = vsel %vm531, %v283, %v394
        %v536 = vsel %vm531, %v285, %v396
        %v537 = vsel %vm531, %v287, %v398
        %v538 = vsel %vm531, %v289, %v400
        %v539 = vsel %vm531, %v291, %v402
        %vm540 = vcmask 523264
        %v541 = vsel %vm540, %v532, %v412
        %v542 = vsel %vm540, %v533, %v414
        %v543 = vsel %vm540, %v534, %v416
        %v544 = vsel %vm540, %v535, %v418
        %v545 = vsel %vm540, %v536, %v420
        %v546 = vsel %vm540, %v537, %v422
        %v547 = vsel %vm540, %v538, %v424
        %v548 = vsel %vm540, %v539, %v426
        %vm549 = vcmask 785408
        %v550 = vsel %vm549, %v541, %v436
        %v551 = vsel %vm549, %v542, %v438
        %v552 = vsel %vm549, %v543, %v440
        %v553 = vsel %vm549, %v544, %v442
        %v554 = vsel %vm549, %v545, %v444
        %v555 = vsel %vm549, %v546, %v446
        %v556 = vsel %vm549, %v547, %v448
        %v557 = vsel %vm549, %v548, %v450
        %v558 = vsel %vm531, %v319, %v460
        %v559 = vsel %vm531, %v322, %v462
        %v560 = vsel %vm531, %v325, %v464
        %v561 = vsel %vm531, %v328, %v466
        %v562 = vsel %vm531, %v331, %v468
        %v563 = vsel %vm531, %v334, %v470
        %v564 = vsel %vm531, %v337, %v472
        %v565 = vsel %vm531, %v367, %v474
        %v566 = vsel %vm540, %v558, %v484
        %v567 = vsel %vm540, %v559, %v486
        %v568 = vsel %vm540, %v560, %v488
        %v569 = vsel %vm540, %v561, %v490
        %v570 = vsel %vm540, %v562, %v492
        %v571 = vsel %vm540, %v563, %v494
        %v572 = vsel %vm540, %v564, %v496
        %v573 = vsel %vm540, %v565, %v498
        %v574 = vsel %vm549, %v566, %v508
        %v575 = vsel %vm549, %v567, %v510
        %v576 = vsel %vm549, %v568, %v512
        %v577 = vsel %vm549, %v569, %v514
        %v578 = vsel %vm549, %v570, %v516
        %v579 = vsel %vm549, %v571, %v518
        %v580 = vsel %vm549, %v572, %v520
        %v581 = vsel %vm549, %v573, %v522
        %v582 = vld [vmem:[%s1] sm:$0xff]
        %v583 = vld [vmem:[%s1 + $0x8] sm:$0xff]
        %v584 = vld [vmem:[%s1 + $0x10] sm:$0xff]
        %v585 = vld [vmem:[%s1 + $0x18] sm:$0xff]
        %v586 = vld [vmem:[%s1 + $0x20] sm:$0xff]
        %v587 = vld [vmem:[%s1 + $0x28] sm:$0xff]
        %v588 = vld [vmem:[%s1 + $0x30] sm:$0xff]
        %v589 = vld [vmem:[%s1 + $0x38] sm:$0xff]
        %v590 = vld [vmem:[%s1 + $0x40] sm:$0xff]
        %v591 = vld [vmem:[%s1 + $0x48] sm:$0xff]
        %v592 = vld [vmem:[%s1 + $0x50] sm:$0xff]
        %v593 = vld [vmem:[%s1 + $0x58] sm:$0xff]
        %v594 = vld [vmem:[%s1 + $0x60] sm:$0xff]
        %v595 = vld [vmem:[%s1 + $0x68] sm:$0xff]
        %v596 = vld [vmem:[%s1 + $0x70] sm:$0xff]
        %v597 = vld [vmem:[%s1 + $0x78] sm:$0xff]
        %v598 = vld [vmem:[%s1 + $0x80] sm:$0xff]
        %v599 = vld [vmem:[%s1 + $0x88] sm:$0xff]
        %v600 = vld [vmem:[%s1 + $0x90] sm:$0xff]
        %v601 = vld [vmem:[%s1 + $0x98] sm:$0xff]
        %v602 = vld [vmem:[%s1 + $0xa0] sm:$0xff]
        %v603 = vld [vmem:[%s1 + $0xa8] sm:$0xff]
        %v604 = vld [vmem:[%s1 + $0xb0] sm:$0xff]
        %v605 = vld [vmem:[%s1 + $0xb8] sm:$0xff]
        %v606 = vld [vmem:[%s1 + $0xc0] sm:$0xff]
        %v607 = vld [vmem:[%s1 + $0xc8] sm:$0xff]
        %v608 = vld [vmem:[%s1 + $0xd0] sm:$0xff]
        %v609 = vld [vmem:[%s1 + $0xd8] sm:$0xff]
        %v610 = vld [vmem:[%s1 + $0xe0] sm:$0xff]
        %v611 = vld [vmem:[%s1 + $0xe8] sm:$0xff]
        %v612 = vld [vmem:[%s1 + $0xf0] sm:$0xff]
        %v613 = vld [vmem:[%s1 + $0xf8] sm:$0xff]
        %v614 = vld [vmem:[%s1 + $0x100] sm:$0xff]
        %v615 = vld [vmem:[%s1 + $0x108] sm:$0xff]
        %v616 = vld [vmem:[%s1 + $0x110] sm:$0xff]
        %v617 = vld [vmem:[%s1 + $0x118] sm:$0xff]
        %v618 = vld [vmem:[%s2] sm:$0x1]
        %v620 = vperm.slane %v618, 0
        %v622 = vsel %vm531, %v347, 0
        %v624 = vsel %vm531, %v350, 0
        %v626 = vsel %vm531, %v353, 0
        %v628 = vsel %vm531, %v356, 0
        %v630 = vsel %vm531, %v359, 0
        %v632 = vsel %vm531, %v362, 0
        %v634 = vsel %vm531, %v378, 0
        %v636 = vsel %vm531, %v386, 0
        %638 = vmatpush.msra.mxu0 %v597
        %639 = vmatpush.msra.mxu0 %v596
        %640 = vmatpush.msra.mxu0 %v595
        %641 = vmatpush.msra.mxu0 %v594
        %642 = vmatpush.msra.mxu0 %v593
        %643 = vmatpush.msra.mxu0 %v592
        %644 = vmatpush.msra.mxu0 %v591
        %645 = vmatpush.msra.mxu0 %v590
        %646 = vmatpush.msra.mxu0 %v589
        %647 = vmatpush.msra.mxu0 %v588
        %648 = vmatpush.msra.mxu0 %v587
        %649 = vmatpush.msra.mxu0 %v586
        %650 = vmatpush.msra.mxu0 %v585
        %651 = vmatpush.msra.mxu0 %v584
        %652 = vmatpush.msra.mxu0 %v583
        %653 = vmatpush.msra.mxu0 %v582
        %654 = vmatmul.f32.gmra.mxu0 %v550
        %v655 = vpop.f32.mrf.mxu0
        %v656 = vadd.f32 %v620, %v655
        %657 = vmatmul.f32.gmra.mxu0 %v551
        %v658 = vpop.f32.mrf.mxu0
        %v659 = vadd.f32 %v620, %v658
        %660 = vmatmul.f32.gmra.mxu0 %v552
        %v661 = vpop.f32.mrf.mxu0
        %v662 = vadd.f32 %v620, %v661
        %663 = vmatmul.f32.gmra.mxu0 %v553
        %v664 = vpop.f32.mrf.mxu0
        %v665 = vadd.f32 %v620, %v664
        %666 = vmatmul.f32.gmra.mxu0 %v554
        %v667 = vpop.f32.mrf.mxu0
        %v668 = vadd.f32 %v620, %v667
        %669 = vmatmul.f32.gmra.mxu0 %v555
        %v670 = vpop.f32.mrf.mxu0
        %v671 = vadd.f32 %v620, %v670
        %672 = vmatmul.f32.gmra.mxu0 %v556
        %v673 = vpop.f32.mrf.mxu0
        %v674 = vadd.f32 %v620, %v673
        %675 = vmatmul.f32.gmra.mxu0 %v557
        %v676 = vpop.f32.mrf.mxu0
        %v677 = vadd.f32 %v620, %v676
        %678 = vdwg.mxu0
        %679 = vmatpush.msra.mxu0 %v613
        %680 = vmatpush.msra.mxu0 %v612
        %681 = vmatpush.msra.mxu0 %v611
        %682 = vmatpush.msra.mxu0 %v610
        %683 = vmatpush.msra.mxu0 %v609
        %684 = vmatpush.msra.mxu0 %v608
        %685 = vmatpush.msra.mxu0 %v607
        %686 = vmatpush.msra.mxu0 %v606
        %687 = vmatpush.msra.mxu0 %v605
        %688 = vmatpush.msra.mxu0 %v604
        %689 = vmatpush.msra.mxu0 %v603
        %690 = vmatpush.msra.mxu0 %v602
        %691 = vmatpush.msra.mxu0 %v601
        %692 = vmatpush.msra.mxu0 %v600
        %693 = vmatpush.msra.mxu0 %v599
        %694 = vmatpush.msra.mxu0 %v598
        %695 = vmatmul.f32.gmra.mxu0 %v574
        %v696 = vpop.f32.mrf.mxu0
        %v697 = vadd.f32 %v656, %v696
        %698 = vmatmul.f32.gmra.mxu0 %v575
        %v699 = vpop.f32.mrf.mxu0
        %v700 = vadd.f32 %v659, %v699
        %701 = vmatmul.f32.gmra.mxu0 %v576
        %v702 = vpop.f32.mrf.mxu0
        %v703 = vadd.f32 %v662, %v702
        %704 = vmatmul.f32.gmra.mxu0 %v577
        %v705 = vpop.f32.mrf.mxu0
        %v706 = vadd.f32 %v665, %v705
        %707 = vmatmul.f32.gmra.mxu0 %v578
        %v708 = vpop.f32.mrf.mxu0
        %v709 = vadd.f32 %v668, %v708
        %710 = vmatmul.f32.gmra.mxu0 %v579
        %v711 = vpop.f32.mrf.mxu0
        %v712 = vadd.f32 %v671, %v711
        %713 = vmatmul.f32.gmra.mxu0 %v580
        %v714 = vpop.f32.mrf.mxu0
        %v715 = vadd.f32 %v674, %v714
        %716 = vmatmul.f32.gmra.mxu0 %v581
        %v717 = vpop.f32.mrf.mxu0
        %v718 = vadd.f32 %v677, %v717
        %719 = vdwg.mxu0
        %720 = vmatpush.msra.mxu0 0.0
        %721 = vmatpush.msra.mxu0 0.0
        %722 = vmatpush.msra.mxu0 0.0
        %723 = vmatpush.msra.mxu0 0.0
        %724 = vmatpush.msra.mxu0 0.0
        %725 = vmatpush.msra.mxu0 0.0
        %726 = vmatpush.msra.mxu0 0.0
        %727 = vmatpush.msra.mxu0 0.0
        %728 = vmatpush.msra.mxu0 0.0
        %729 = vmatpush.msra.mxu0 0.0
        %730 = vmatpush.msra.mxu0 0.0
        %731 = vmatpush.msra.mxu0 0.0
        %732 = vmatpush.msra.mxu0 %v617
        %733 = vmatpush.msra.mxu0 %v616
        %734 = vmatpush.msra.mxu0 %v615
        %735 = vmatpush.msra.mxu0 %v614
        %736 = vmatmul.f32.gmra.mxu0 %v622
        %v737 = vpop.f32.mrf.mxu0
        %v738 = vadd.f32 %v697, %v737
        %739 = vmatmul.f32.gmra.mxu0 %v624
        %v740 = vpop.f32.mrf.mxu0
        %v741 = vadd.f32 %v700, %v740
        %742 = vmatmul.f32.gmra.mxu0 %v626
        %v743 = vpop.f32.mrf.mxu0
        %v744 = vadd.f32 %v703, %v743
        %745 = vmatmul.f32.gmra.mxu0 %v628
        %v746 = vpop.f32.mrf.mxu0
        %v747 = vadd.f32 %v706, %v746
        %748 = vmatmul.f32.gmra.mxu0 %v630
        %v749 = vpop.f32.mrf.mxu0
        %v750 = vadd.f32 %v709, %v749
        %751 = vmatmul.f32.gmra.mxu0 %v632
        %v752 = vpop.f32.mrf.mxu0
        %v753 = vadd.f32 %v712, %v752
        %754 = vmatmul.f32.gmra.mxu0 %v634
        %v755 = vpop.f32.mrf.mxu0
        %v756 = vadd.f32 %v715, %v755
        %757 = vmatmul.f32.gmra.mxu0 %v636
        %v758 = vpop.f32.mrf.mxu0
        %v759 = vadd.f32 %v718, %v758
        %760 = vdwg.mxu0
        %v761 = vadd.f32 %v738, %v741
        %v762 = vadd.f32 %v761, %v744
        %v763 = vadd.f32 %v762, %v747
        %v764 = vadd.f32 %v763, %v750
        %v765 = vadd.f32 %v764, %v753
        %v766 = vadd.f32 %v765, %v756
        %v767 = vadd.f32 %v766, %v759
        %v768 = vrot.slane %v767, 4
        %v769 = vadd.f32 %v767, %v768
        %v770 = vrot.slane %v769, 2
        %v771 = vadd.f32 %v769, %v770
        %v772 = vrot.slane %v771, 1
        %v773 = vadd.f32 %v771, %v772
        %v774 = vld [vmem:[%s5] sm:$0xff]
        %v775 = vld [vmem:[%s5 + $0x8] sm:$0xff]
        %v776 = vld [vmem:[%s5 + $0x10] sm:$0xff]
        %v777 = vld [vmem:[%s5 + $0x18] sm:$0xff]
        %v778 = vld [vmem:[%s5 + $0x20] sm:$0xff]
        %v779 = vld [vmem:[%s5 + $0x28] sm:$0xff]
        %v780 = vld [vmem:[%s5 + $0x30] sm:$0xff]
        %v781 = vld [vmem:[%s5 + $0x38] sm:$0xff]
        %v782 = vld [vmem:[%s5 + $0x40] sm:$0xff]
        %v783 = vld [vmem:[%s5 + $0x48] sm:$0xff]
        %v784 = vld [vmem:[%s5 + $0x50] sm:$0xff]
        %v785 = vld [vmem:[%s5 + $0x58] sm:$0xff]
        %v786 = vld [vmem:[%s5 + $0x60] sm:$0xff]
        %v787 = vld [vmem:[%s5 + $0x68] sm:$0xff]
        %v788 = vld [vmem:[%s5 + $0x70] sm:$0xff]
        %v789 = vld [vmem:[%s5 + $0x78] sm:$0xff]
        %790 = vmatpush.msra.mxu0 %v789
        %791 = vmatpush.msra.mxu0 %v788
        %792 = vmatpush.msra.mxu0 %v787
        %793 = vmatpush.msra.mxu0 %v786
        %794 = vmatpush.msra.mxu0 %v785
        %795 = vmatpush.msra.mxu0 %v784
        %796 = vmatpush.msra.mxu0 %v783
        %797 = vmatpush.msra.mxu0 %v782
        %798 = vmatpush.msra.mxu0 %v781
        %799 = vmatpush.msra.mxu0 %v780
        %800 = vmatpush.msra.mxu0 %v779
        %801 = vmatpush.msra.mxu0 %v778
        %802 = vmatpush.msra.mxu0 %v777
        %803 = vmatpush.msra.mxu0 %v776
        %804 = vmatpush.msra.mxu0 %v775
        %805 = vmatpush.msra.mxu0 %v774
        %806 = vmatmul.f32.gmra.mxu0 %v773
        %v807 = vpop.f32.mrf.mxu0
        %v808 = vadd.f32 0.0, %v807
        %809 = vdwg.mxu0
        %v810 = vmul.f32 %v808, 0.00390625
        %v811 = vld [vmem:[%s6] sm:$0xff]
        %v812 = vld [vmem:[%s6 + $0x8] sm:$0xff]
        %v813 = vld [vmem:[%s6 + $0x10] sm:$0xff]
        %v814 = vld [vmem:[%s6 + $0x18] sm:$0xff]
        %v816 = vsel %vm531, %v810, 0
        %818 = vmatpush.msra.mxu0 0.0
        %819 = vmatpush.msra.mxu0 0.0
        %820 = vmatpush.msra.mxu0 0.0
        %821 = vmatpush.msra.mxu0 0.0
        %822 = vmatpush.msra.mxu0 0.0
        %823 = vmatpush.msra.mxu0 0.0
        %824 = vmatpush.msra.mxu0 0.0
        %825 = vmatpush.msra.mxu0 0.0
        %826 = vmatpush.msra.mxu0 0.0
        %827 = vmatpush.msra.mxu0 0.0
        %828 = vmatpush.msra.mxu0 0.0
        %829 = vmatpush.msra.mxu0 0.0
        %830 = vmatpush.msra.mxu0 %v814
        %831 = vmatpush.msra.mxu0 %v813
        %832 = vmatpush.msra.mxu0 %v812
        %833 = vmatpush.msra.mxu0 %v811
        %834 = vmatmul.f32.gmra.mxu0 %v816
        %v835 = vpop.f32.mrf.mxu0
        %v836 = vadd.f32 0.0, %v835
        %837 = vdwg.mxu0
        %v838 = vperm.slane %v836, 0
        %v839 = vsub.f32 %v738, %v838
        %v840 = vsub.f32 %v741, %v838
        %v841 = vsub.f32 %v744, %v838
        %v842 = vsub.f32 %v747, %v838
        %v843 = vsub.f32 %v750, %v838
        %v844 = vsub.f32 %v753, %v838
        %v845 = vsub.f32 %v756, %v838
        %v846 = vsub.f32 %v759, %v838
        %v847 = vmul.f32 %v839, %v839
        %v848 = vmul.f32 %v840, %v840
        %v849 = vmul.f32 %v841, %v841
        %v850 = vmul.f32 %v842, %v842
        %v851 = vmul.f32 %v843, %v843
        %v852 = vmul.f32 %v844, %v844
        %v853 = vmul.f32 %v845, %v845
        %v854 = vmul.f32 %v846, %v846
        %v855 = vadd.f32 %v847, %v848
        %v856 = vadd.f32 %v855, %v849
        %v857 = vadd.f32 %v856, %v850
        %v858 = vadd.f32 %v857, %v851
        %v859 = vadd.f32 %v858, %v852
        %v860 = vadd.f32 %v859, %v853
        %v861 = vadd.f32 %v860, %v854
        %v862 = vrot.slane %v861, 4
        %v863 = vadd.f32 %v861, %v862
        %v864 = vrot.slane %v863, 2
        %v865 = vadd.f32 %v863, %v864
        %v866 = vrot.slane %v865, 1
        %v867 = vadd.f32 %v865, %v866
        %868 = vmatpush.msra.mxu0 %v789
        %869 = vmatpush.msra.mxu0 %v788
        %870 = vmatpush.msra.mxu0 %v787
        %871 = vmatpush.msra.mxu0 %v786
        %872 = vmatpush.msra.mxu0 %v785
        %873 = vmatpush.msra.mxu0 %v784
        %874 = vmatpush.msra.mxu0 %v783
        %875 = vmatpush.msra.mxu0 %v782
        %876 = vmatpush.msra.mxu0 %v781
        %877 = vmatpush.msra.mxu0 %v780
        %878 = vmatpush.msra.mxu0 %v779
        %879 = vmatpush.msra.mxu0 %v778
        %880 = vmatpush.msra.mxu0 %v777
        %881 = vmatpush.msra.mxu0 %v776
        %882 = vmatpush.msra.mxu0 %v775
        %883 = vmatpush.msra.mxu0 %v774
        %884 = vmatmul.f32.gmra.mxu0 %v867
        %v885 = vpop.f32.mrf.mxu0
        %v886 = vadd.f32 0.0, %v885
        %887 = vdwg.mxu0
        %v888 = vmul.f32 %v886, 0.00390625
        %v890 = vsel %vm531, %v888, 0
        %892 = vmatpush.msra.mxu0 0.0
        %893 = vmatpush.msra.mxu0 0.0
        %894 = vmatpush.msra.mxu0 0.0
        %895 = vmatpush.msra.mxu0 0.0
        %896 = vmatpush.msra.mxu0 0.0
        %897 = vmatpush.msra.mxu0 0.0
        %898 = vmatpush.msra.mxu0 0.0
        %899 = vmatpush.msra.mxu0 0.0
        %900 = vmatpush.msra.mxu0 0.0
        %901 = vmatpush.msra.mxu0 0.0
        %902 = vmatpush.msra.mxu0 0.0
        %903 = vmatpush.msra.mxu0 0.0
        %904 = vmatpush.msra.mxu0 %v814
        %905 = vmatpush.msra.mxu0 %v813
        %906 = vmatpush.msra.mxu0 %v812
        %907 = vmatpush.msra.mxu0 %v811
        %908 = vmatmul.f32.gmra.mxu0 %v890
        %v909 = vpop.f32.mrf.mxu0
        %v910 = vadd.f32 1e-05, %v909
        %911 = vdwg.mxu0
        %v912 = vrsqrt.pop %v910
        %v913 = vmul.f32 %v912, %v910
        %v914 = vmul.f32 %v913, %v912
        %v915 = vmul.f32 0.5, %v914
        %v916 = vsub.f32 1.5, %v915
        %v917 = vmul.f32 %v912, %v916
        %vm918 = vweird.f32 %v910
        %vm919 = vweird.f32 %v912
        %vm920 = vmor %vm918, %vm919
        %v921 = vsel %vm920, %v912, %v917
        %v922 = vperm.slane %v921, 0
        %v923 = vmul.f32 %v839, %v922
        %v924 = vmul.f32 %v840, %v922
        %v925 = vmul.f32 %v841, %v922
        %v926 = vmul.f32 %v842, %v922
        %v927 = vmul.f32 %v843, %v922
        %v928 = vmul.f32 %v844, %v922
        %v929 = vmul.f32 %v845, %v922
        %v930 = vmul.f32 %v846, %v922
        %v931 = vld [vmem:[%s3] sm:$0x1]
        %v933 = vperm.slane %v931, 0
        %v935 = vmul.f32 %v923, %v933
        %v936 = vmul.f32 %v924, %v933
        %v937 = vmul.f32 %v925, %v933
        %v938 = vmul.f32 %v926, %v933
        %v939 = vmul.f32 %v927, %v933
        %v940 = vmul.f32 %v928, %v933
        %v941 = vmul.f32 %v929, %v933
        %v942 = vmul.f32 %v930, %v933
        %v943 = vld [vmem:[%s4] sm:$0x1]
        %v945 = vperm.slane %v943, 0
        %v947 = vadd.f32 %v935, %v945
        %v948 = vadd.f32 %v936, %v945
        %v949 = vadd.f32 %v937, %v945
        %v950 = vadd.f32 %v938, %v945
        %v951 = vadd.f32 %v939, %v945
        %v952 = vadd.f32 %v940, %v945
        %v953 = vadd.f32 %v941, %v945
        %v954 = vadd.f32 %v942, %v945
        %vm955 = vcmp.ge.f32.partialorder %v947, 0.0
        %vm956 = vcmp.ge.f32.partialorder %v948, 0.0
        %vm957 = vcmp.ge.f32.partialorder %v949, 0.0
        %vm958 = vcmp.ge.f32.partialorder %v950, 0.0
        %vm959 = vcmp.ge.f32.partialorder %v951, 0.0
        %vm960 = vcmp.ge.f32.partialorder %v952, 0.0
        %vm961 = vcmp.ge.f32.partialorder %v953, 0.0
        %vm962 = vcmp.ge.f32.partialorder %v954, 0.0
        %v963 = vmul.f32 %v947, 0.1
        %v964 = vmul.f32 %v948, 0.1
        %v965 = vmul.f32 %v949, 0.1
        %v966 = vmul.f32 %v950, 0.1
        %v967 = vmul.f32 %v951, 0.1
        %v968 = vmul.f32 %v952, 0.1
        %v969 = vmul.f32 %v953, 0.1
        %v970 = vmul.f32 %v954, 0.1
        %v971 = vsel %vm955, %v947, %v963
        %v972 = vsel %vm956, %v948, %v964
        %v973 = vsel %vm957, %v949, %v965
        %v974 = vsel %vm958, %v950, %v966
        %v975 = vsel %vm959, %v951, %v967
        %v976 = vsel %vm960, %v952, %v968
        %v977 = vsel %vm961, %v953, %v969
        %v978 = vsel %vm962, %v954, %v970
        %979 = vst.msk [vmem:[%s271] sm:$0xff] %vm540, %v971
        %980 = vst.msk [vmem:[%s271 + $0x10] sm:$0xff] %vm540, %v972
        %981 = vst.msk [vmem:[%s271 + $0x20] sm:$0xff] %vm540, %v973
        %982 = vst.msk [vmem:[%s271 + $0x30] sm:$0xff] %vm540, %v974
        %983 = vst.msk [vmem:[%s271 + $0x40] sm:$0xff] %vm540, %v975
        %984 = vst.msk [vmem:[%s271 + $0x50] sm:$0xff] %vm540, %v976
        %985 = vst.msk [vmem:[%s271 + $0x60] sm:$0xff] %vm540, %v977
        %986 = vst.msk [vmem:[%s271 + $0x70] sm:$0xff] %vm540, %v978
        %995 = vrot.lane.b32.xlu0 %v971, 64
        %v996 = vpop.permute.xlu0 %995
        %997 = vrot.lane.b32.xlu0 %v972, 64
        %v998 = vpop.permute.xlu0 %997
        %999 = vrot.lane.b32.xlu0 %v973, 64
        %v1000 = vpop.permute.xlu0 %999
        %1001 = vrot.lane.b32.xlu0 %v974, 64
        %v1002 = vpop.permute.xlu0 %1001
        %1003 = vrot.lane.b32.xlu0 %v975, 64
        %v1004 = vpop.permute.xlu0 %1003
        %1005 = vrot.lane.b32.xlu0 %v976, 64
        %v1006 = vpop.permute.xlu0 %1005
        %1007 = vrot.lane.b32.xlu0 %v977, 64
        %v1008 = vpop.permute.xlu0 %1007
        %1009 = vrot.lane.b32.xlu0 %v978, 64
        %v1010 = vpop.permute.xlu0 %1009
        %s1019 = scalar_lea.vmem %s271, 8 [#allocation2]
        %1020 = vst.msk [vmem:[%s1019] sm:$0xff] %vm540, %v996
        %1021 = vst.msk [vmem:[%s1019 + $0x10] sm:$0xff] %vm540, %v998
        %1022 = vst.msk [vmem:[%s1019 + $0x20] sm:$0xff] %vm540, %v1000
        %1023 = vst.msk [vmem:[%s1019 + $0x30] sm:$0xff] %vm540, %v1002
        %1024 = vst.msk [vmem:[%s1019 + $0x40] sm:$0xff] %vm540, %v1004
        %1025 = vst.msk [vmem:[%s1019 + $0x50] sm:$0xff] %vm540, %v1006
        %1026 = vst.msk [vmem:[%s1019 + $0x60] sm:$0xff] %vm540, %v1008
        %1027 = vst.msk [vmem:[%s1019 + $0x70] sm:$0xff] %vm540, %v1010
        %s1028 = sand.u32 %s181, 1
        %s1029 = scalar_lea.sflag [#allocation3], %s1028
        %s1030 = sand.u32 %s181, 1
        %s1031 = smul.addr %s1030, 128
        %s1032 = scalar_lea.vmem [#allocation2], %s1031
        // Predicated region
        $region49: #{tpu_custom_call.1} parent=47 // pred_check
          %p1033 = pneg %p191
        $region50: #{tpu_custom_call.1} parent=47 // pred_check_branch
          %1035 = sbr.rel (%p1033) target = $region52
        $region51: #{tpu_custom_call.1} parent=47 // pred_region
          %1037 = vsyncadd %s1029, 0
          %s1038 = smul.addr %s21, 16
          %s1039 = smul.addr %s1038, 8
          %s1040 = scalar_lea.hbm %s7, %s1039
          %s1041 = sshll.u32 %s1032, 4
          %s1042 = int_to_ptr.vmem [resolvable:$true] %s1041
          %s1043 = sshll.u32 %s1040, 4
          %s1044 = int_to_ptr.hbm [resolvable:$true] %s1043
          %1049 = dma.vmem_to_hbm [thread:$0]  %s1042, 2048, %s1044, %s1029, 128, 128, 8
        $region52: #{tpu_custom_call.1} parent=47 // pred_fallthru
          _
      $region48: #{tpu_custom_call.1} parent=5 // pred_fallthru
        _
      %p1050 = scmp.le.s32.totalorder 2, %s16
      // Predicated region
      $region53: #{tpu_custom_call.1} parent=5 // pred_check
        %p1051 = pneg %p1050
      $region54: #{tpu_custom_call.1} parent=5 // pred_check_branch
        %1053 = sbr.rel (%p1051) target = $region56
      $region55: #{tpu_custom_call.1} parent=5 // pred_region
        %s1054 = ssub.s32 %s16, 2
        // Predicated region
        $region57: #{tpu_custom_call.1} parent=55 // pred_check
          %p1055 = pneg %p197
        $region58: #{tpu_custom_call.1} parent=55 // pred_check_branch
          %1057 = sbr.rel (%p1055) target = $region60
        $region59: #{tpu_custom_call.1} parent=55 // pred_region
          %s1058 = sand.u32 %s182, 1
          %s1059 = scalar_lea.sflag [#allocation3], %s1058
          %s1060 = sand.u32 %s182, 1
          %s1061 = smul.addr %s1060, 128
          %s1062 = scalar_lea.vmem [#allocation2], %s1061
          %1064 = dma.done %s1059, 2048
        $region60: #{tpu_custom_call.1} parent=55 // pred_fallthru
          _
      $region56: #{tpu_custom_call.1} parent=5 // pred_fallthru
        _
    $region6: #{tpu_custom_call.1} parent=1 // loop_footer
      %s20 = sadd.s32 1, %s16
    $region7: #{tpu_custom_call.1} parent=1 // loop_footer_branch
      %15 = sbr.rel target = $region3
    $region8: #{tpu_custom_call.1} parent=1 // loop_exit
      _
    %1065 = vsyncpa [#allocation3], 1
    %s1066 = scalar_lea.sflag [#allocation3], 1
    %1067 = vsyncpa %s1066, 1

</llo_original>
